<compile_context>
chip_gen: v6e
topology: v6e:2x2x1
jax: 0.10.0
libtpu: 0.0.40
codegen_flags: <defaults>
</compile_context>

<pallas_src>
import math

import jax
import jax.numpy as jnp
from jax.experimental import pallas as pl
from jax.experimental.pallas import tpu as pltpu

_LN_EPS = 1e-5
_GELU_C = 0.7978845608028654  # sqrt(2/pi)


def _detect_vmem_capacity():
    try:
        cap = int(pltpu.get_tpu_info().vmem_capacity_bytes)
        if cap > 0:
            return cap
    except Exception:
        pass
    return 64 * 1024 * 1024  # conservative: assume v7x (smallest VMEM)


_VMEM_CAP = _detect_vmem_capacity()
_VMEM_LIMIT = int(_VMEM_CAP * 0.8)          # headroom for Mosaic scratch/sems
_BIG_VMEM = _VMEM_CAP >= 96 * 1024 * 1024   # v5e/v6e (128 MiB) vs v7x (64 MiB)

_TM_TARGET = 512 if _BIG_VMEM else 256      # token-tile rows
_TN_TARGET = 512                            # QKV output-column tile
_TH_TARGET = 1024 if _BIG_VMEM else 512     # MLP hidden-dim chunk
_HBW_TARGET = 256                           # attention head-block lane width


def _sublane_align(dtype):
    return {1: 32, 2: 16, 4: 8}.get(jnp.dtype(dtype).itemsize, 8)


def _pick_tile(n, target, align):
    """Largest `align`-multiple divisor of n that is <= target (else n itself,
    which always satisfies the 'equals full dim' tiling rule)."""
    if n <= target:
        return n
    t = (min(n, target) // align) * align
    while t >= align:
        if n % t == 0:
            return t
        t -= align
    return n


def _pick_head_block(D, hd, target):
    """Lane width of an attention head block: a multiple of hd that divides D
    and is either a multiple of 128 (lane-dense stores) or D itself."""
    cands = [w for w in range(hd, D + 1, hd)
             if D % w == 0 and (w % 128 == 0 or w == D)]
    le = [w for w in cands if w <= target]
    return max(le) if le else min(cands)


# ----------------------------------------------------------------------------
# Kernel 1: LayerNorm(ln_1) + Q/K/V projections, tiled over tokens and the
# projection output columns (weight chunks stay resident across the token
# sweep because the column axis is the *outer* grid dim).
# ----------------------------------------------------------------------------
def _ln_qkv_kernel(x_ref, g_ref, b_ref, wq_ref, wk_ref, wv_ref,
                   bq_ref, bk_ref, bv_ref, q_ref, k_ref, v_ref):
    x = x_ref[...].astype(jnp.float32)                      # (TM, D)
    mu = jnp.mean(x, axis=-1, keepdims=True)
    xc = x - mu
    var = jnp.mean(xc * xc, axis=-1, keepdims=True)
    xn = xc * jax.lax.rsqrt(var + _LN_EPS)
    xn = xn * g_ref[...].astype(jnp.float32) + b_ref[...].astype(jnp.float32)
    xn = xn.astype(wq_ref.dtype)     # bf16 weights -> bf16 MXU operands

    def proj(w_ref, bias_ref, o_ref):
        y = jnp.dot(xn, w_ref[...], preferred_element_type=jnp.float32)
        o_ref[...] = (y + bias_ref[...].astype(jnp.float32)).astype(o_ref.dtype)

    proj(wq_ref, bq_ref, q_ref)
    proj(wk_ref, bk_ref, k_ref)
    proj(wv_ref, bv_ref, v_ref)


def _ln_qkv(x2d, gamma, beta, wq, wk, wv, bq, bk, bv):
    M, D = x2d.shape
    TM = _pick_tile(M, _TM_TARGET, _sublane_align(x2d.dtype))
    TN = _pick_tile(D, _TN_TARGET, 128)
    num_m, num_n = M // TM, D // TN

    x_spec = pl.BlockSpec((TM, D), lambda n, i: (i, 0))
    vec_spec = pl.BlockSpec((1, D), lambda n, i: (0, 0))
    w_spec = pl.BlockSpec((D, TN), lambda n, i: (0, n))
    b_spec = pl.BlockSpec((1, TN), lambda n, i: (0, n))
    o_spec = pl.BlockSpec((TM, TN), lambda n, i: (i, n))

    out_sds = jax.ShapeDtypeStruct((M, D), x2d.dtype)
    return pl.pallas_call(
        _ln_qkv_kernel,
        out_shape=(out_sds, out_sds, out_sds),
        grid=(num_n, num_m),    # column-tile outer: weight chunk revisited over i
        in_specs=[x_spec, vec_spec, vec_spec,
                  w_spec, w_spec, w_spec, b_spec, b_spec, b_spec],
        out_specs=(o_spec, o_spec, o_spec),
        compiler_params=pltpu.CompilerParams(
            dimension_semantics=("parallel", "parallel"),
            vmem_limit_bytes=_VMEM_LIMIT),
    )(x2d, gamma.reshape(1, D), beta.reshape(1, D),
      wq, wk, wv, bq.reshape(1, D), bk.reshape(1, D), bv.reshape(1, D))


# ----------------------------------------------------------------------------
# Kernel 2: causal softmax attention, one (batch, head-block) per grid point.
# q/k/v blocks are read straight out of the (B, T, D) projection slabs and the
# output block is written straight into the (B, T, D) slab (lane-dense).
# ----------------------------------------------------------------------------
def _make_attn_kernel(heads_per_block, hd):
    scale = 1.0 / math.sqrt(hd)

    def kernel(q_ref, k_ref, v_ref, o_ref):
        T = q_ref.shape[1]
        row = jax.lax.broadcasted_iota(jnp.int32, (T, T), 0)
        col = jax.lax.broadcasted_iota(jnp.int32, (T, T), 1)
        causal = row >= col
        outs = []
        for h in range(heads_per_block):           # static unroll over heads
            lo, hi = h * hd, (h + 1) * hd
            q = q_ref[0, :, lo:hi]                  # (T, hd), input dtype
            k = k_ref[0, :, lo:hi]
            v = v_ref[0, :, lo:hi]
            # QK^T on the MXU in the input dtype, f32 accumulation.
            s = jax.lax.dot_general(q, k, (((1,), (1,)), ((), ())),
                                    preferred_element_type=jnp.float32) * scale
            s = jnp.where(causal, s, -1e30)
            m = jnp.max(s, axis=-1, keepdims=True)
            p = jnp.exp(s - m)
            p = p / jnp.sum(p, axis=-1, keepdims=True)
            out = jnp.dot(p.astype(v.dtype), v,
                          preferred_element_type=jnp.float32)
            outs.append(out.astype(o_ref.dtype))
        o_ref[0] = outs[0] if len(outs) == 1 else jnp.concatenate(outs, axis=-1)

    return kernel


def _causal_attention(q, k, v, n_head):
    B, T, D = q.shape
    hd = D // n_head
    HBW = _pick_head_block(D, hd, _HBW_TARGET)
    spec = pl.BlockSpec((1, T, HBW), lambda b, hb: (b, 0, hb))
    # TODO(synk): flash-style KV tiling (online softmax + causal block skip)
    # for long sequences; here the whole (T, T) score tile lives in VMEM.
    return pl.pallas_call(
        _make_attn_kernel(HBW // hd, hd),
        out_shape=jax.ShapeDtypeStruct((B, T, D), q.dtype),
        grid=(B, D // HBW),
        in_specs=[spec, spec, spec],
        out_specs=spec,
        compiler_params=pltpu.CompilerParams(
            dimension_semantics=("parallel", "parallel"),
            vmem_limit_bytes=_VMEM_LIMIT),
    )(q, k, v)


# ----------------------------------------------------------------------------
# Kernel 3: fused attn c_proj + residual + LayerNorm(ln_2) + MLP + residual.
# Grid = (M tiles [parallel], hidden-dim tiles [arbitrary reduction]).
# ----------------------------------------------------------------------------
def _attn_mlp_kernel(x_ref, y_ref, wp_ref, bp_ref, g_ref, b_ref,
                     w1_ref, b1_ref, w2_ref, b2_ref, o_ref,
                     x1_ref, xn_ref, acc_ref):
    h_idx = pl.program_id(1)

    @pl.when(h_idx == 0)
    def _():
        # attention output projection + first residual
        yproj = jnp.dot(y_ref[...].astype(wp_ref.dtype), wp_ref[...],
                        preferred_element_type=jnp.float32)
        x1 = (x_ref[...].astype(jnp.float32) + yproj
              + bp_ref[...].astype(jnp.float32))
        x1_ref[...] = x1
        # ln_2
        mu = jnp.mean(x1, axis=-1, keepdims=True)
        xc = x1 - mu
        var = jnp.mean(xc * xc, axis=-1, keepdims=True)
        xn = xc * jax.lax.rsqrt(var + _LN_EPS)
        xn_ref[...] = (xn * g_ref[...].astype(jnp.float32)
                       + b_ref[...].astype(jnp.float32))
        acc_ref[...] = jnp.zeros_like(acc_ref)

    xn = xn_ref[...].astype(w1_ref.dtype)
    # c_fc chunk: (TM, D) @ (D, TH) + b1[TH]
    hpre = jnp.dot(xn, w1_ref[...], preferred_element_type=jnp.float32)
    hpre = hpre + b1_ref[...].astype(jnp.float32)
    # GELU, tanh approximation (nn.GELU(approximate='tanh')); tanh -> EUP
    hact = 0.5 * hpre * (1.0 + jnp.tanh(
        _GELU_C * (hpre + 0.044715 * hpre * hpre * hpre)))
    # c_proj chunk accumulated into f32 scratch: (TM, TH) @ (TH, D)
    acc_ref[...] += jnp.dot(hact.astype(w2_ref.dtype), w2_ref[...],
                            preferred_element_type=jnp.float32)

    @pl.when(h_idx == pl.num_programs(1) - 1)
    def _():
        y = acc_ref[...] + b2_ref[...].astype(jnp.float32) + x1_ref[...]
        o_ref[...] = y.astype(o_ref.dtype)


def _attn_proj_mlp(x2d, y2d, wp, bp, gamma, beta, w1, b1, w2, b2):
    M, D = x2d.shape
    H = w1.shape[1]
    TM = _pick_tile(M, _TM_TARGET, _sublane_align(x2d.dtype))
    TH = _pick_tile(H, _TH_TARGET, 128)
    num_m, num_h = M // TM, H // TH

    tile_spec = pl.BlockSpec((TM, D), lambda i, h: (i, 0))
    vec_spec = pl.BlockSpec((1, D), lambda i, h: (0, 0))

    return pl.pallas_call(
        _attn_mlp_kernel,
        out_shape=jax.ShapeDtypeStruct((M, D), x2d.dtype),
        grid=(num_m, num_h),
        in_specs=[
            tile_spec,                                     # x residual tile
            tile_spec,                                     # attention out tile
            pl.BlockSpec((D, D), lambda i, h: (0, 0)),     # attn c_proj weight
            vec_spec,                                      # attn c_proj bias
            vec_spec, vec_spec,                            # ln_2 gamma / beta
            pl.BlockSpec((D, TH), lambda i, h: (0, h)),    # c_fc weight chunk
            pl.BlockSpec((1, TH), lambda i, h: (0, h)),    # c_fc bias chunk
            pl.BlockSpec((TH, D), lambda i, h: (h, 0)),    # mlp c_proj chunk
            vec_spec,                                      # mlp c_proj bias
        ],
        out_specs=pl.BlockSpec((TM, D), lambda i, h: (i, 0)),
        scratch_shapes=[
            pltpu.VMEM((TM, D), jnp.float32),   # x1 = x + attn_proj (residual)
            pltpu.VMEM((TM, D), jnp.float32),   # ln_2(x1)
            pltpu.VMEM((TM, D), jnp.float32),   # MLP output accumulator
        ],
        compiler_params=pltpu.CompilerParams(
            dimension_semantics=("parallel", "arbitrary"),
            vmem_limit_bytes=_VMEM_LIMIT),
    )(x2d, y2d, wp, bp.reshape(1, D), gamma.reshape(1, D), beta.reshape(1, D),
      w1, b1.reshape(1, H), w2, b2.reshape(1, D))


# ----------------------------------------------------------------------------
# Full Block forward (no wrapper transposes: only metadata reshapes)
# ----------------------------------------------------------------------------
def block_forward(x, params, n_head):
    B, T, D = x.shape
    M = B * T
    x2d = x.reshape(M, D)

    # sublayer 1: ln_1 -> q/k/v projections, each (M, D)
    q, k, v = _ln_qkv(x2d, params["ln1_g"], params["ln1_b"],
                      params["w_q"], params["w_k"], params["w_v"],
                      params["b_q"], params["b_k"], params["b_v"])

    # causal attention directly on the (B, T, D) slabs -> (B, T, D)
    y = _causal_attention(q.reshape(B, T, D), k.reshape(B, T, D),
                          v.reshape(B, T, D), n_head)

    # fused: attn c_proj + residual + ln_2 + MLP + residual
    out = _attn_proj_mlp(x2d, y.reshape(M, D),
                         params["w_attn_proj"], params["b_attn_proj"],
                         params["ln2_g"], params["ln2_b"],
                         params["w_fc"], params["b_fc"],
                         params["w_proj"], params["b_proj"])
    return out.reshape(B, T, D)


# ----------------------------------------------------------------------------
# Pure-JAX reference
# ----------------------------------------------------------------------------
def block_reference(x, params, n_head):
    B, T, D = x.shape
    hd = D // n_head

    def ln(z, g, b):
        mu = jnp.mean(z, axis=-1, keepdims=True)
        var = jnp.mean((z - mu) ** 2, axis=-1, keepdims=True)
        return (z - mu) / jnp.sqrt(var + _LN_EPS) * g + b

    xn = ln(x, params["ln1_g"], params["ln1_b"])
    q = xn @ params["w_q"] + params["b_q"]
    k = xn @ params["w_k"] + params["b_k"]
    v = xn @ params["w_v"] + params["b_v"]

    def heads(z):
        return jnp.transpose(z.reshape(B, T, n_head, hd), (0, 2, 1, 3))

    q, k, v = heads(q), heads(k), heads(v)
    s = jnp.einsum("bhqd,bhkd->bhqk", q, k) / math.sqrt(hd)
    mask = jnp.tril(jnp.ones((T, T), dtype=bool))
    s = jnp.where(mask, s, -jnp.inf)
    p = jax.nn.softmax(s, axis=-1)
    y = jnp.einsum("bhqk,bhkd->bhqd", p, v)
    y = jnp.transpose(y, (0, 2, 1, 3)).reshape(B, T, D)
    x = x + y @ params["w_attn_proj"] + params["b_attn_proj"]

    xn = ln(x, params["ln2_g"], params["ln2_b"])
    h = xn @ params["w_fc"] + params["b_fc"]
    h = 0.5 * h * (1.0 + jnp.tanh(_GELU_C * (h + 0.044715 * h ** 3)))
    x = x + h @ params["w_proj"] + params["b_proj"]
    return x


def _make_params(key, D, dtype=jnp.float32):
    H = 4 * D
    ks = jax.random.split(key, 16)

    def w(k, shape):
        return (0.02 * jax.random.normal(k, shape, jnp.float32)).astype(dtype)

    return dict(
        ln1_g=(1.0 + 0.1 * jax.random.normal(ks[0], (D,), jnp.float32)).astype(dtype),
        ln1_b=(0.1 * jax.random.normal(ks[1], (D,), jnp.float32)).astype(dtype),
        # w_q / w_k / w_v are the column split of GPT-2's fused c_attn weight.
        w_q=w(ks[2], (D, D)), w_k=w(ks[3], (D, D)), w_v=w(ks[4], (D, D)),
        b_q=w(ks[5], (D,)), b_k=w(ks[6], (D,)), b_v=w(ks[7], (D,)),
        w_attn_proj=w(ks[8], (D, D)), b_attn_proj=w(ks[9], (D,)),
        ln2_g=(1.0 + 0.1 * jax.random.normal(ks[10], (D,), jnp.float32)).astype(dtype),
        ln2_b=(0.1 * jax.random.normal(ks[11], (D,), jnp.float32)).astype(dtype),
        w_fc=w(ks[12], (D, H)), b_fc=w(ks[13], (H,)),
        w_proj=w(ks[14], (H, D)), b_proj=jnp.zeros((D,), dtype),
    )


if __name__ == "__main__":
    configs = [
        # small config consistent with the module: n_embd=32, n_head=4, T=8, B=2
        dict(B=2, T=8, D=32, n_head=4),
        # lane-aligned config exercising head-blocking (HBW=256 -> 2 head blocks)
        # and the tiled MLP hidden-dim reduction
        dict(B=2, T=128, D=512, n_head=8),
    ]
    key = jax.random.PRNGKey(0)
    for cfg in configs:
        key, kx, kp = jax.random.split(key, 3)
        B, T, D, n_head = cfg["B"], cfg["T"], cfg["D"], cfg["n_head"]
        x = jax.random.normal(kx, (B, T, D), dtype=jnp.float32)
        params = _make_params(kp, D)

        out = jax.block_until_ready(block_forward(x, params, n_head))
        ref = block_reference(x, params, n_head)

        assert out.shape == (B, T, D)
        err = float(jnp.max(jnp.abs(out - ref)))
        assert jnp.allclose(out, ref, atol=2e-3, rtol=2e-3), (cfg, err)

    print("KERNEL_OK")
</pallas_src>

<mosaic_0001>
module attributes {stable_mosaic.version = 11 : i64} {
  func.func @_ln_qkv_kernel(%arg0: i32, %arg1: i32, %arg2: memref<16x32xf32, #tpu.memory_space<vmem>>, %arg3: memref<1x32xf32, #tpu.memory_space<vmem>>, %arg4: memref<1x32xf32, #tpu.memory_space<vmem>>, %arg5: memref<32x32xf32, #tpu.memory_space<vmem>>, %arg6: memref<32x32xf32, #tpu.memory_space<vmem>>, %arg7: memref<32x32xf32, #tpu.memory_space<vmem>>, %arg8: memref<1x32xf32, #tpu.memory_space<vmem>>, %arg9: memref<1x32xf32, #tpu.memory_space<vmem>>, %arg10: memref<1x32xf32, #tpu.memory_space<vmem>>, %arg11: memref<16x32xf32, #tpu.memory_space<vmem>>, %arg12: memref<16x32xf32, #tpu.memory_space<vmem>>, %arg13: memref<16x32xf32, #tpu.memory_space<vmem>>) attributes {dimension_semantics = [#tpu.dimension_semantics<parallel>, #tpu.dimension_semantics<parallel>], iteration_bounds = array<i64: 1, 1>, scalar_prefetch = 0 : i64, scratch_operands = 0 : i64, tpu.core_type = #tpu.core_type<tc>, window_params = [{transform_indices = @transform_0, window_bounds = array<i64: 16, 32>}, {pipeline_mode = #tpu.pipeline_mode<synchronous>, transform_indices = @transform_1, window_bounds = array<i64: 1, 32>}, {pipeline_mode = #tpu.pipeline_mode<synchronous>, transform_indices = @transform_2, window_bounds = array<i64: 1, 32>}, {transform_indices = @transform_3, window_bounds = array<i64: 32, 32>}, {transform_indices = @transform_4, window_bounds = array<i64: 32, 32>}, {transform_indices = @transform_5, window_bounds = array<i64: 32, 32>}, {transform_indices = @transform_6, window_bounds = array<i64: 1, 32>}, {transform_indices = @transform_7, window_bounds = array<i64: 1, 32>}, {transform_indices = @transform_8, window_bounds = array<i64: 1, 32>}, {transform_indices = @transform_9, window_bounds = array<i64: 16, 32>}, {transform_indices = @transform_10, window_bounds = array<i64: 16, 32>}, {transform_indices = @transform_11, window_bounds = array<i64: 16, 32>}]} {
    %c0 = arith.constant 0 : index
    %c0_0 = arith.constant 0 : index
    %0 = vector.load %arg2[%c0, %c0_0] : memref<16x32xf32, #tpu.memory_space<vmem>>, vector<16x32xf32>
    %cst = arith.constant dense<0.000000e+00> : vector<16xf32>
    %1 = vector.multi_reduction <add>, %0, %cst [1] : vector<16x32xf32> to vector<16xf32>
    %2 = vector.shape_cast %1 : vector<16xf32> to vector<16x1xf32>
    %cst_1 = arith.constant 3.200000e+01 : f32
    %3 = vector.broadcast %cst_1 : f32 to vector<16x1xf32>
    %4 = arith.divf %2, %3 : vector<16x1xf32>
    %5 = vector.broadcast %4 : vector<16x1xf32> to vector<16x32xf32>
    %6 = arith.subf %0, %5 : vector<16x32xf32>
    %7 = arith.mulf %6, %6 : vector<16x32xf32>
    %cst_2 = arith.constant dense<0.000000e+00> : vector<16xf32>
    %8 = vector.multi_reduction <add>, %7, %cst_2 [1] : vector<16x32xf32> to vector<16xf32>
    %9 = vector.shape_cast %8 : vector<16xf32> to vector<16x1xf32>
    %cst_3 = arith.constant 3.200000e+01 : f32
    %10 = vector.broadcast %cst_3 : f32 to vector<16x1xf32>
    %11 = arith.divf %9, %10 : vector<16x1xf32>
    %cst_4 = arith.constant 9.99999974E-6 : f32
    %12 = vector.broadcast %cst_4 : f32 to vector<16x1xf32>
    %13 = arith.addf %11, %12 : vector<16x1xf32>
    %14 = math.rsqrt %13 : vector<16x1xf32>
    %15 = vector.broadcast %14 : vector<16x1xf32> to vector<16x32xf32>
    %16 = arith.mulf %6, %15 : vector<16x32xf32>
    %c0_5 = arith.constant 0 : index
    %c0_6 = arith.constant 0 : index
    %17 = vector.load %arg3[%c0_5, %c0_6] : memref<1x32xf32, #tpu.memory_space<vmem>>, vector<1x32xf32>
    %18 = vector.broadcast %17 : vector<1x32xf32> to vector<16x32xf32>
    %19 = arith.mulf %16, %18 : vector<16x32xf32>
    %c0_7 = arith.constant 0 : index
    %c0_8 = arith.constant 0 : index
    %20 = vector.load %arg4[%c0_7, %c0_8] : memref<1x32xf32, #tpu.memory_space<vmem>>, vector<1x32xf32>
    %21 = vector.broadcast %20 : vector<1x32xf32> to vector<16x32xf32>
    %22 = arith.addf %19, %21 : vector<16x32xf32>
    %c0_9 = arith.constant 0 : index
    %c0_10 = arith.constant 0 : index
    %23 = vector.load %arg5[%c0_9, %c0_10] : memref<32x32xf32, #tpu.memory_space<vmem>>, vector<32x32xf32>
    %cst_11 = arith.constant dense<0.000000e+00> : vector<16x32xf32>
    %24 = tpu.matmul %22, %23, %cst_11 {dimension_numbers = #tpu.dot_dimension_numbers<[1], [0], [0], [1], [0, 0, 1, 1], [], []>} : vector<16x32xf32>, vector<32x32xf32>, vector<16x32xf32> -> vector<16x32xf32>
    %c0_12 = arith.constant 0 : index
    %c0_13 = arith.constant 0 : index
    %25 = vector.load %arg8[%c0_12, %c0_13] : memref<1x32xf32, #tpu.memory_space<vmem>>, vector<1x32xf32>
    %26 = vector.broadcast %25 : vector<1x32xf32> to vector<16x32xf32>
    %27 = arith.addf %24, %26 : vector<16x32xf32>
    %c0_14 = arith.constant 0 : index
    %c0_15 = arith.constant 0 : index
    %28 = vector.load %arg11[%c0_14, %c0_15] : memref<16x32xf32, #tpu.memory_space<vmem>>, vector<16x32xf32>
    tpu.vector_store %arg11[%c0_14, %c0_15], %27 {strides = array<i32>} : memref<16x32xf32, #tpu.memory_space<vmem>>, vector<16x32xf32>,
    %c0_16 = arith.constant 0 : index
    %c0_17 = arith.constant 0 : index
    %29 = vector.load %arg6[%c0_16, %c0_17] : memref<32x32xf32, #tpu.memory_space<vmem>>, vector<32x32xf32>
    %cst_18 = arith.constant dense<0.000000e+00> : vector<16x32xf32>
    %30 = tpu.matmul %22, %29, %cst_18 {dimension_numbers = #tpu.dot_dimension_numbers<[1], [0], [0], [1], [0, 0, 1, 1], [], []>} : vector<16x32xf32>, vector<32x32xf32>, vector<16x32xf32> -> vector<16x32xf32>
    %c0_19 = arith.constant 0 : index
    %c0_20 = arith.constant 0 : index
    %31 = vector.load %arg9[%c0_19, %c0_20] : memref<1x32xf32, #tpu.memory_space<vmem>>, vector<1x32xf32>
    %32 = vector.broadcast %31 : vector<1x32xf32> to vector<16x32xf32>
    %33 = arith.addf %30, %32 : vector<16x32xf32>
    %c0_21 = arith.constant 0 : index
    %c0_22 = arith.constant 0 : index
    %34 = vector.load %arg12[%c0_21, %c0_22] : memref<16x32xf32, #tpu.memory_space<vmem>>, vector<16x32xf32>
    tpu.vector_store %arg12[%c0_21, %c0_22], %33 {strides = array<i32>} : memref<16x32xf32, #tpu.memory_space<vmem>>, vector<16x32xf32>,
    %c0_23 = arith.constant 0 : index
    %c0_24 = arith.constant 0 : index
    %35 = vector.load %arg7[%c0_23, %c0_24] : memref<32x32xf32, #tpu.memory_space<vmem>>, vector<32x32xf32>
    %cst_25 = arith.constant dense<0.000000e+00> : vector<16x32xf32>
    %36 = tpu.matmul %22, %35, %cst_25 {dimension_numbers = #tpu.dot_dimension_numbers<[1], [0], [0], [1], [0, 0, 1, 1], [], []>} : vector<16x32xf32>, vector<32x32xf32>, vector<16x32xf32> -> vector<16x32xf32>
    %c0_26 = arith.constant 0 : index
    %c0_27 = arith.constant 0 : index
    %37 = vector.load %arg10[%c0_26, %c0_27] : memref<1x32xf32, #tpu.memory_space<vmem>>, vector<1x32xf32>
    %38 = vector.broadcast %37 : vector<1x32xf32> to vector<16x32xf32>
    %39 = arith.addf %36, %38 : vector<16x32xf32>
    %c0_28 = arith.constant 0 : index
    %c0_29 = arith.constant 0 : index
    %40 = vector.load %arg13[%c0_28, %c0_29] : memref<16x32xf32, #tpu.memory_space<vmem>>, vector<16x32xf32>
    tpu.vector_store %arg13[%c0_28, %c0_29], %39 {strides = array<i32>} : memref<16x32xf32, #tpu.memory_space<vmem>>, vector<16x32xf32>,
    return
  }
  func.func @transform_0(%arg0: i32, %arg1: i32) -> (i32, i32) {
    %c0_i32 = arith.constant 0 : i32
    %c0_i32_0 = arith.constant 0 : i32
    return %arg1, %c0_i32 : i32, i32
  }
  func.func @transform_1(%arg0: i32, %arg1: i32) -> (i32, i32) {
    %c0_i32 = arith.constant 0 : i32
    %c0_i32_0 = arith.constant 0 : i32
    %c0_i32_1 = arith.constant 0 : i32
    return %c0_i32, %c0_i32_0 : i32, i32
  }
  func.func @transform_2(%arg0: i32, %arg1: i32) -> (i32, i32) {
    %c0_i32 = arith.constant 0 : i32
    %c0_i32_0 = arith.constant 0 : i32
    %c0_i32_1 = arith.constant 0 : i32
    return %c0_i32, %c0_i32_0 : i32, i32
  }
  func.func @transform_3(%arg0: i32, %arg1: i32) -> (i32, i32) {
    %c0_i32 = arith.constant 0 : i32
    %c0_i32_0 = arith.constant 0 : i32
    return %c0_i32, %arg0 : i32, i32
  }
  func.func @transform_4(%arg0: i32, %arg1: i32) -> (i32, i32) {
    %c0_i32 = arith.constant 0 : i32
    %c0_i32_0 = arith.constant 0 : i32
    return %c0_i32, %arg0 : i32, i32
  }
  func.func @transform_5(%arg0: i32, %arg1: i32) -> (i32, i32) {
    %c0_i32 = arith.constant 0 : i32
    %c0_i32_0 = arith.constant 0 : i32
    return %c0_i32, %arg0 : i32, i32
  }
  func.func @transform_6(%arg0: i32, %arg1: i32) -> (i32, i32) {
    %c0_i32 = arith.constant 0 : i32
    %c0_i32_0 = arith.constant 0 : i32
    return %c0_i32, %arg0 : i32, i32
  }
  func.func @transform_7(%arg0: i32, %arg1: i32) -> (i32, i32) {
    %c0_i32 = arith.constant 0 : i32
    %c0_i32_0 = arith.constant 0 : i32
    return %c0_i32, %arg0 : i32, i32
  }
  func.func @transform_8(%arg0: i32, %arg1: i32) -> (i32, i32) {
    %c0_i32 = arith.constant 0 : i32
    %c0_i32_0 = arith.constant 0 : i32
    return %c0_i32, %arg0 : i32, i32
  }
  func.func @transform_9(%arg0: i32, %arg1: i32) -> (i32, i32) {
    %c0_i32 = arith.constant 0 : i32
    return %arg1, %arg0 : i32, i32
  }
  func.func @transform_10(%arg0: i32, %arg1: i32) -> (i32, i32) {
    %c0_i32 = arith.constant 0 : i32
    return %arg1, %arg0 : i32, i32
  }
  func.func @transform_11(%arg0: i32, %arg1: i32) -> (i32, i32) {
    %c0_i32 = arith.constant 0 : i32
    return %arg1, %arg0 : i32, i32
  }
}

</mosaic_0001>

<llo_original>
// kernel: tpu_custom_call.1
$region0: #{tpu_custom_call.1}
  #allocation0 [shape = 'u32[]', space=smem, size = 0x4, offset = 0x4, fixed_abs, tag = 'smem constant byte address 0x4 - core index']
  #allocation1 [shape = 'u32[144,128]{1,0:T(1,128)}', space=vmem, size = 0x12000, scoped, tag = 'internal scratch']
  %s0 = inlined_call_operand.hbm [shape: f32[16,32], index: 0, kind: input, shape index: {}]
  %s1 = inlined_call_operand.vmem [shape: f32[1,32], index: 1, kind: input, shape index: {}]
  %s2 = inlined_call_operand.vmem [shape: f32[1,32], index: 2, kind: input, shape index: {}]
  %s3 = inlined_call_operand.hbm [shape: f32[32,32], index: 3, kind: input, shape index: {}]
  %s4 = inlined_call_operand.hbm [shape: f32[32,32], index: 4, kind: input, shape index: {}]
  %s5 = inlined_call_operand.hbm [shape: f32[32,32], index: 5, kind: input, shape index: {}]
  %s6 = inlined_call_operand.vmem [shape: f32[1,32], index: 6, kind: input, shape index: {}]
  %s7 = inlined_call_operand.vmem [shape: f32[1,32], index: 7, kind: input, shape index: {}]
  %s8 = inlined_call_operand.vmem [shape: f32[1,32], index: 8, kind: input, shape index: {}]
  %s9 = inlined_call_operand.hbm [shape: f32[16,32], index: 9, kind: output, shape index: {0}]
  %s10 = inlined_call_operand.hbm [shape: f32[16,32], index: 10, kind: output, shape index: {1}]
  %s11 = inlined_call_operand.hbm [shape: f32[16,32], index: 11, kind: output, shape index: {2}]
  %12 = xla_tuple %s9, %s10, %s11
  %s13 = sld [smem:[#allocation0]]
  $region78: #{tpu_custom_call.1} parent=0
    _
  %s15 = ssub.s32 1, %s13
  %s16 = scalar_select 0, %s15, %s13
  $region1: #{tpu_custom_call.1} parent=0
    #allocation2 [shape = 'u8[8192]{0}', space=vmem, size = 0x2000, scoped, tag = 'input window, operand 0, single buffered']
    #allocation3 [shape = 's32[1]{0}', space=sflag, size = 0x4, scoped, tag = 'scoped memory for tpu_custom_call.1']
    #allocation4 [shape = 's32[1]{0}', space=sflag, size = 0x4, scoped, tag = 'scoped memory for tpu_custom_call.1']
    #allocation5 [shape = 'u8[16384]{0}', space=vmem, size = 0x4000, scoped, tag = 'input window, operand 3, single buffered']
    #allocation6 [shape = 's32[1]{0}', space=sflag, size = 0x4, scoped, tag = 'scoped memory for tpu_custom_call.1']
    #allocation7 [shape = 'u8[16384]{0}', space=vmem, size = 0x4000, scoped, tag = 'input window, operand 4, single buffered']
    #allocation8 [shape = 'u8[16384]{0}', space=vmem, size = 0x4000, scoped, tag = 'input window, operand 5, single buffered']
    #allocation9 [shape = 's32[1]{0}', space=sflag, size = 0x4, scoped, tag = 'scoped memory for tpu_custom_call.1']
    #allocation10 [shape = 'u8[8192]{0}', space=vmem, size = 0x2000, scoped, tag = 'output window, operand 0, single buffered']
    #allocation11 [shape = 'u8[8192]{0}', space=vmem, size = 0x2000, scoped, tag = 'output window, operand 1, single buffered']
    #allocation12 [shape = 's32[1]{0}', space=sflag, size = 0x4, scoped, tag = 'scoped memory for tpu_custom_call.1']
    #allocation13 [shape = 'u8[8192]{0}', space=vmem, size = 0x2000, scoped, tag = 'output window, operand 2, single buffered']
    %17 = vsyncpa [#allocation3], 0
    %18 = vsyncpa [#allocation6], 0
    %19 = vsyncpa [#allocation9], 0
    %20 = vsyncpa [#allocation4], 0
    %21 = vsyncpa [#allocation12], 0
    // Predicated region
    $region2: #{tpu_custom_call.1} parent=1 // pred_check
      _
    $region3: #{tpu_custom_call.1} parent=1 // pred_check_branch
      %23 = sbr.rel (0) target = $region5
    $region4: #{tpu_custom_call.1} parent=1 // pred_region
      %s25 = ssub.s32 256, 256
      %26 = vsyncadd [#allocation3], %s25
      %s27 = sshll.u32 [#allocation2], 4
      %s28 = int_to_ptr.vmem [resolvable:$true] %s27
      %33 = dma.hbm_to_vmem [thread:$0]  %s0, 256, %s28, [#allocation3], 128, 128, 8
    $region5: #{tpu_custom_call.1} parent=1 // pred_fallthru
      _
    // Predicated region
    $region6: #{tpu_custom_call.1} parent=1 // pred_check
      _
    $region7: #{tpu_custom_call.1} parent=1 // pred_check_branch
      %35 = sbr.rel (0) target = $region9
    $region8: #{tpu_custom_call.1} parent=1 // pred_region
      _
    $region9: #{tpu_custom_call.1} parent=1 // pred_fallthru
      _
    // Predicated region
    $region10: #{tpu_custom_call.1} parent=1 // pred_check
      _
    $region11: #{tpu_custom_call.1} parent=1 // pred_check_branch
      %37 = sbr.rel (0) target = $region13
    $region12: #{tpu_custom_call.1} parent=1 // pred_region
      _
    $region13: #{tpu_custom_call.1} parent=1 // pred_fallthru
      _
    // Predicated region
    $region14: #{tpu_custom_call.1} parent=1 // pred_check
      _
    $region15: #{tpu_custom_call.1} parent=1 // pred_check_branch
      %39 = sbr.rel (0) target = $region17
    $region16: #{tpu_custom_call.1} parent=1 // pred_region
      %s41 = ssub.s32 512, 512
      %42 = vsyncadd [#allocation6], %s41
      %s43 = sshll.u32 [#allocation5], 4
      %s44 = int_to_ptr.vmem [resolvable:$true] %s43
      %49 = dma.hbm_to_vmem [thread:$0]  %s3, 512, %s44, [#allocation6], 128, 128, 8
    $region17: #{tpu_custom_call.1} parent=1 // pred_fallthru
      _
    // Predicated region
    $region18: #{tpu_custom_call.1} parent=1 // pred_check
      _
    $region19: #{tpu_custom_call.1} parent=1 // pred_check_branch
      %51 = sbr.rel (0) target = $region21
    $region20: #{tpu_custom_call.1} parent=1 // pred_region
      %s53 = ssub.s32 512, 512
      %54 = vsyncadd [#allocation6], %s53
      %s55 = sshll.u32 [#allocation7], 4
      %s56 = int_to_ptr.vmem [resolvable:$true] %s55
      %61 = dma.hbm_to_vmem [thread:$0]  %s4, 512, %s56, [#allocation6], 128, 128, 8
    $region21: #{tpu_custom_call.1} parent=1 // pred_fallthru
      _
    // Predicated region
    $region22: #{tpu_custom_call.1} parent=1 // pred_check
      _
    $region23: #{tpu_custom_call.1} parent=1 // pred_check_branch
      %63 = sbr.rel (0) target = $region25
    $region24: #{tpu_custom_call.1} parent=1 // pred_region
      %s65 = ssub.s32 512, 512
      %66 = vsyncadd [#allocation9], %s65
      %s67 = sshll.u32 [#allocation8], 4
      %s68 = int_to_ptr.vmem [resolvable:$true] %s67
      %73 = dma.hbm_to_vmem [thread:$0]  %s5, 512, %s68, [#allocation9], 128, 128, 8
    $region25: #{tpu_custom_call.1} parent=1 // pred_fallthru
      _
    // Predicated region
    $region26: #{tpu_custom_call.1} parent=1 // pred_check
      _
    $region27: #{tpu_custom_call.1} parent=1 // pred_check_branch
      %75 = sbr.rel (0) target = $region29
    $region28: #{tpu_custom_call.1} parent=1 // pred_region
      _
    $region29: #{tpu_custom_call.1} parent=1 // pred_fallthru
      _
    // Predicated region
    $region30: #{tpu_custom_call.1} parent=1 // pred_check
      _
    $region31: #{tpu_custom_call.1} parent=1 // pred_check_branch
      %77 = sbr.rel (0) target = $region33
    $region32: #{tpu_custom_call.1} parent=1 // pred_region
      _
    $region33: #{tpu_custom_call.1} parent=1 // pred_fallthru
      _
    // Predicated region
    $region34: #{tpu_custom_call.1} parent=1 // pred_check
      _
    $region35: #{tpu_custom_call.1} parent=1 // pred_check_branch
      %79 = sbr.rel (0) target = $region37
    $region36: #{tpu_custom_call.1} parent=1 // pred_region
      _
    $region37: #{tpu_custom_call.1} parent=1 // pred_fallthru
      _
    // Predicated region
    $region38: #{tpu_custom_call.1} parent=1 // pred_check
      _
    $region39: #{tpu_custom_call.1} parent=1 // pred_check_branch
      %81 = sbr.rel (0) target = $region41
    $region40: #{tpu_custom_call.1} parent=1 // pred_region
      %82 = dma.done [#allocation3], 256
    $region41: #{tpu_custom_call.1} parent=1 // pred_fallthru
      _
    // Predicated region
    $region42: #{tpu_custom_call.1} parent=1 // pred_check
      _
    $region43: #{tpu_custom_call.1} parent=1 // pred_check_branch
      %84 = sbr.rel (0) target = $region45
    $region44: #{tpu_custom_call.1} parent=1 // pred_region
      %85 = dma.done [#allocation6], 512
    $region45: #{tpu_custom_call.1} parent=1 // pred_fallthru
      _
    // Predicated region
    $region46: #{tpu_custom_call.1} parent=1 // pred_check
      _
    $region47: #{tpu_custom_call.1} parent=1 // pred_check_branch
      %87 = sbr.rel (0) target = $region49
    $region48: #{tpu_custom_call.1} parent=1 // pred_region
      %88 = dma.done [#allocation6], 512
    $region49: #{tpu_custom_call.1} parent=1 // pred_fallthru
      _
    // Predicated region
    $region50: #{tpu_custom_call.1} parent=1 // pred_check
      _
    $region51: #{tpu_custom_call.1} parent=1 // pred_check_branch
      %90 = sbr.rel (0) target = $region53
    $region52: #{tpu_custom_call.1} parent=1 // pred_region
      %91 = dma.done [#allocation9], 512
    $region53: #{tpu_custom_call.1} parent=1 // pred_fallthru
      _
    %v92 = vld [vmem:[#allocation2] sm:$0xff]
    %v93 = vld [vmem:[#allocation2 + $0x8] sm:$0xff]
    %vm94 = vcmask 261120
    %v95 = vsel %vm94, %v92, 0.0
    %96 = vadd.xlane.f32.xlu0 %v95
    %v97 = vpop.xlane.xlu0 %96
    %v98 = vsel %vm94, %v93, 0.0
    %99 = vadd.xlane.f32.xlu0 %v98
    %v100 = vpop.xlane.xlu0 %99
    %v101 = vrcp.pop 32.0
    %v102 = vmul.f32 %v97, %v101
    %v103 = vmul.f32 %v100, %v101
    %v104 = vsub.f32 %v92, %v102
    %v105 = vsub.f32 %v93, %v103
    %v106 = vmul.f32 %v104, %v104
    %v107 = vmul.f32 %v105, %v105
    %v108 = vsel %vm94, %v106, 0.0
    %109 = vadd.xlane.f32.xlu0 %v108
    %v110 = vpop.xlane.xlu0 %109
    %v111 = vsel %vm94, %v107, 0.0
    %112 = vadd.xlane.f32.xlu0 %v111
    %v113 = vpop.xlane.xlu0 %112
    %v114 = vmul.f32 %v110, %v101
    %v115 = vmul.f32 %v113, %v101
    %v116 = vadd.f32 %v114, 1e-05
    %v117 = vadd.f32 %v115, 1e-05
    %v118 = vrsqrt.pop %v116
    %v119 = vrsqrt.pop %v117
    %v120 = vmul.f32 %v104, %v118
    %v121 = vmul.f32 %v105, %v119
    %v122 = vld [vmem:[%s1] sm:$0x1]
    %v124 = vlaneseq
    %v125 = vshrl.u32 %v124, 7
    %v126 = vsub.s32 0, %v125
    %v127 = vrot.slane %v122, %v126
    %v129 = vmul.f32 %v120, %v127
    %v130 = vmul.f32 %v121, %v127
    %v131 = vld [vmem:[%s2] sm:$0x1]
    %v133 = vlaneseq
    %v134 = vshrl.u32 %v133, 7
    %v135 = vsub.s32 0, %v134
    %v136 = vrot.slane %v131, %v135
    %v138 = vadd.f32 %v129, %v136
    %v139 = vadd.f32 %v130, %v136
    %v140 = vld [vmem:[#allocation5] sm:$0xff]
    %v141 = vld [vmem:[#allocation5 + $0x8] sm:$0xff]
    %v142 = vld [vmem:[#allocation5 + $0x10] sm:$0xff]
    %v143 = vld [vmem:[#allocation5 + $0x18] sm:$0xff]
    %v144 = vld [vmem:[%s6] sm:$0x1]
    %v146 = vlaneseq
    %v147 = vshrl.u32 %v146, 7
    %v148 = vsub.s32 0, %v147
    %v149 = vrot.slane %v144, %v148
    %v152 = vsel %vm94, %v138, 0
    %v155 = vsel %vm94, %v139, 0
    %157 = vmatprep.subr.mxu0 0.0
    %158 = vmatpush1.msra.mxu0 0.0
    %159 = vmatprep.subr.mxu0 0.0
    %160 = vmatpush1.msra.mxu0 0.0
    %161 = vmatprep.subr.mxu0 0.0
    %162 = vmatpush1.msra.mxu0 0.0
    %163 = vmatprep.subr.mxu0 0.0
    %164 = vmatpush1.msra.mxu0 0.0
    %165 = vmatprep.subr.mxu0 0.0
    %166 = vmatpush1.msra.mxu0 0.0
    %167 = vmatprep.subr.mxu0 0.0
    %168 = vmatpush1.msra.mxu0 0.0
    %169 = vmatprep.subr.mxu0 0.0
    %170 = vmatpush1.msra.mxu0 0.0
    %171 = vmatprep.subr.mxu0 0.0
    %172 = vmatpush1.msra.mxu0 0.0
    %173 = vmatprep.subr.mxu0 0.0
    %174 = vmatpush1.msra.mxu0 0.0
    %175 = vmatprep.subr.mxu0 0.0
    %176 = vmatpush1.msra.mxu0 0.0
    %177 = vmatprep.subr.mxu0 0.0
    %178 = vmatpush1.msra.mxu0 0.0
    %179 = vmatprep.subr.mxu0 0.0
    %180 = vmatpush1.msra.mxu0 0.0
    %181 = vmatprep.subr.mxu0 0.0
    %182 = vmatpush1.msra.mxu0 %v143
    %183 = vmatprep.subr.mxu0 0.0
    %184 = vmatpush1.msra.mxu0 %v142
    %185 = vmatprep.subr.mxu0 0.0
    %186 = vmatpush1.msra.mxu0 %v141
    %187 = vmatprep.subr.mxu0 0.0
    %188 = vmatpush1.msra.mxu0 %v140
    %189 = vmatprep.subr.mxu0 0.0
    %190 = vmatpush2.msra.mxu0 0.0
    %191 = vmatprep.subr.mxu0 0.0
    %192 = vmatpush2.msra.mxu0 0.0
    %193 = vmatprep.subr.mxu0 0.0
    %194 = vmatpush2.msra.mxu0 0.0
    %195 = vmatprep.subr.mxu0 0.0
    %196 = vmatpush2.msra.mxu0 0.0
    %197 = vmatprep.subr.mxu0 0.0
    %198 = vmatpush2.msra.mxu0 0.0
    %199 = vmatprep.subr.mxu0 0.0
    %200 = vmatpush2.msra.mxu0 0.0
    %201 = vmatprep.subr.mxu0 0.0
    %202 = vmatpush2.msra.mxu0 0.0
    %203 = vmatprep.subr.mxu0 0.0
    %204 = vmatpush2.msra.mxu0 0.0
    %205 = vmatprep.subr.mxu0 0.0
    %206 = vmatpush2.msra.mxu0 0.0
    %207 = vmatprep.subr.mxu0 0.0
    %208 = vmatpush2.msra.mxu0 0.0
    %209 = vmatprep.subr.mxu0 0.0
    %210 = vmatpush2.msra.mxu0 0.0
    %211 = vmatprep.subr.mxu0 0.0
    %212 = vmatpush2.msra.mxu0 0.0
    %213 = vmatprep.subr.mxu0 0.0
    %214 = vmatpush2.msra.mxu0 0.0
    %215 = vmatprep.subr.mxu0 0.0
    %216 = vmatpush2.msra.mxu0 0.0
    %217 = vmatprep.subr.mxu0 0.0
    %218 = vmatpush2.msra.mxu0 0.0
    %219 = vmatprep.subr.mxu0 0.0
    %220 = vmatpush2.msra.mxu0 0.0
    %221 = vmatprep.mubr.f32.mxu0 0.0
    %222 = vmatmul.mubr.f32.gmra.mxu0 %v152
    %v223 = vpop.f32.mrf.mxu0
    %v224 = vadd.f32 %v149, %v223
    %v225 = vpop.f32.mrf.mxu0
    %226 = vmatprep.mubr.f32.mxu0 0.0
    %227 = vmatmul.mubr.f32.gmra.mxu0 %v155
    %v228 = vpop.f32.mrf.mxu0
    %v229 = vadd.f32 %v149, %v228
    %v230 = vpop.f32.mrf.mxu0
    %231 = vdwg.mxu0
    %232 = vst.msk [vmem:[#allocation10] sm:$0xff] %vm94, %v224
    %233 = vst.msk [vmem:[#allocation10 + $0x8] sm:$0xff] %vm94, %v229
    %v234 = vld [vmem:[#allocation7] sm:$0xff]
    %v235 = vld [vmem:[#allocation7 + $0x8] sm:$0xff]
    %v236 = vld [vmem:[#allocation7 + $0x10] sm:$0xff]
    %v237 = vld [vmem:[#allocation7 + $0x18] sm:$0xff]
    %v238 = vld [vmem:[%s7] sm:$0x1]
    %v240 = vlaneseq
    %v241 = vshrl.u32 %v240, 7
    %v242 = vsub.s32 0, %v241
    %v243 = vrot.slane %v238, %v242
    %245 = vmatprep.subr.mxu0 0.0
    %246 = vmatpush1.msra.mxu0 0.0
    %247 = vmatprep.subr.mxu0 0.0
    %248 = vmatpush1.msra.mxu0 0.0
    %249 = vmatprep.subr.mxu0 0.0
    %250 = vmatpush1.msra.mxu0 0.0
    %251 = vmatprep.subr.mxu0 0.0
    %252 = vmatpush1.msra.mxu0 0.0
    %253 = vmatprep.subr.mxu0 0.0
    %254 = vmatpush1.msra.mxu0 0.0
    %255 = vmatprep.subr.mxu0 0.0
    %256 = vmatpush1.msra.mxu0 0.0
    %257 = vmatprep.subr.mxu0 0.0
    %258 = vmatpush1.msra.mxu0 0.0
    %259 = vmatprep.subr.mxu0 0.0
    %260 = vmatpush1.msra.mxu0 0.0
    %261 = vmatprep.subr.mxu0 0.0
    %262 = vmatpush1.msra.mxu0 0.0
    %263 = vmatprep.subr.mxu0 0.0
    %264 = vmatpush1.msra.mxu0 0.0
    %265 = vmatprep.subr.mxu0 0.0
    %266 = vmatpush1.msra.mxu0 0.0
    %267 = vmatprep.subr.mxu0 0.0
    %268 = vmatpush1.msra.mxu0 0.0
    %269 = vmatprep.subr.mxu0 0.0
    %270 = vmatpush1.msra.mxu0 %v237
    %271 = vmatprep.subr.mxu0 0.0
    %272 = vmatpush1.msra.mxu0 %v236
    %273 = vmatprep.subr.mxu0 0.0
    %274 = vmatpush1.msra.mxu0 %v235
    %275 = vmatprep.subr.mxu0 0.0
    %276 = vmatpush1.msra.mxu0 %v234
    %277 = vmatprep.subr.mxu0 0.0
    %278 = vmatpush2.msra.mxu0 0.0
    %279 = vmatprep.subr.mxu0 0.0
    %280 = vmatpush2.msra.mxu0 0.0
    %281 = vmatprep.subr.mxu0 0.0
    %282 = vmatpush2.msra.mxu0 0.0
    %283 = vmatprep.subr.mxu0 0.0
    %284 = vmatpush2.msra.mxu0 0.0
    %285 = vmatprep.subr.mxu0 0.0
    %286 = vmatpush2.msra.mxu0 0.0
    %287 = vmatprep.subr.mxu0 0.0
    %288 = vmatpush2.msra.mxu0 0.0
    %289 = vmatprep.subr.mxu0 0.0
    %290 = vmatpush2.msra.mxu0 0.0
    %291 = vmatprep.subr.mxu0 0.0
    %292 = vmatpush2.msra.mxu0 0.0
    %293 = vmatprep.subr.mxu0 0.0
    %294 = vmatpush2.msra.mxu0 0.0
    %295 = vmatprep.subr.mxu0 0.0
    %296 = vmatpush2.msra.mxu0 0.0
    %297 = vmatprep.subr.mxu0 0.0
    %298 = vmatpush2.msra.mxu0 0.0
    %299 = vmatprep.subr.mxu0 0.0
    %300 = vmatpush2.msra.mxu0 0.0
    %301 = vmatprep.subr.mxu0 0.0
    %302 = vmatpush2.msra.mxu0 0.0
    %303 = vmatprep.subr.mxu0 0.0
    %304 = vmatpush2.msra.mxu0 0.0
    %305 = vmatprep.subr.mxu0 0.0
    %306 = vmatpush2.msra.mxu0 0.0
    %307 = vmatprep.subr.mxu0 0.0
    %308 = vmatpush2.msra.mxu0 0.0
    %309 = vmatprep.mubr.f32.mxu0 0.0
    %310 = vmatmul.mubr.f32.gmra.mxu0 %v152
    %v311 = vpop.f32.mrf.mxu0
    %v312 = vadd.f32 %v243, %v311
    %v313 = vpop.f32.mrf.mxu0
    %314 = vmatprep.mubr.f32.mxu0 0.0
    %315 = vmatmul.mubr.f32.gmra.mxu0 %v155
    %v316 = vpop.f32.mrf.mxu0
    %v317 = vadd.f32 %v243, %v316
    %v318 = vpop.f32.mrf.mxu0
    %319 = vdwg.mxu0
    %320 = vst.msk [vmem:[#allocation11] sm:$0xff] %vm94, %v312
    %321 = vst.msk [vmem:[#allocation11 + $0x8] sm:$0xff] %vm94, %v317
    %v322 = vld [vmem:[#allocation8] sm:$0xff]
    %v323 = vld [vmem:[#allocation8 + $0x8] sm:$0xff]
    %v324 = vld [vmem:[#allocation8 + $0x10] sm:$0xff]
    %v325 = vld [vmem:[#allocation8 + $0x18] sm:$0xff]
    %v326 = vld [vmem:[%s8] sm:$0x1]
    %v328 = vlaneseq
    %v329 = vshrl.u32 %v328, 7
    %v330 = vsub.s32 0, %v329
    %v331 = vrot.slane %v326, %v330
    %333 = vmatprep.subr.mxu0 0.0
    %334 = vmatpush1.msra.mxu0 0.0
    %335 = vmatprep.subr.mxu0 0.0
    %336 = vmatpush1.msra.mxu0 0.0
    %337 = vmatprep.subr.mxu0 0.0
    %338 = vmatpush1.msra.mxu0 0.0
    %339 = vmatprep.subr.mxu0 0.0
    %340 = vmatpush1.msra.mxu0 0.0
    %341 = vmatprep.subr.mxu0 0.0
    %342 = vmatpush1.msra.mxu0 0.0
    %343 = vmatprep.subr.mxu0 0.0
    %344 = vmatpush1.msra.mxu0 0.0
    %345 = vmatprep.subr.mxu0 0.0
    %346 = vmatpush1.msra.mxu0 0.0
    %347 = vmatprep.subr.mxu0 0.0
    %348 = vmatpush1.msra.mxu0 0.0
    %349 = vmatprep.subr.mxu0 0.0
    %350 = vmatpush1.msra.mxu0 0.0
    %351 = vmatprep.subr.mxu0 0.0
    %352 = vmatpush1.msra.mxu0 0.0
    %353 = vmatprep.subr.mxu0 0.0
    %354 = vmatpush1.msra.mxu0 0.0
    %355 = vmatprep.subr.mxu0 0.0
    %356 = vmatpush1.msra.mxu0 0.0
    %357 = vmatprep.subr.mxu0 0.0
    %358 = vmatpush1.msra.mxu0 %v325
    %359 = vmatprep.subr.mxu0 0.0
    %360 = vmatpush1.msra.mxu0 %v324
    %361 = vmatprep.subr.mxu0 0.0
    %362 = vmatpush1.msra.mxu0 %v323
    %363 = vmatprep.subr.mxu0 0.0
    %364 = vmatpush1.msra.mxu0 %v322
    %365 = vmatprep.subr.mxu0 0.0
    %366 = vmatpush2.msra.mxu0 0.0
    %367 = vmatprep.subr.mxu0 0.0
    %368 = vmatpush2.msra.mxu0 0.0
    %369 = vmatprep.subr.mxu0 0.0
    %370 = vmatpush2.msra.mxu0 0.0
    %371 = vmatprep.subr.mxu0 0.0
    %372 = vmatpush2.msra.mxu0 0.0
    %373 = vmatprep.subr.mxu0 0.0
    %374 = vmatpush2.msra.mxu0 0.0
    %375 = vmatprep.subr.mxu0 0.0
    %376 = vmatpush2.msra.mxu0 0.0
    %377 = vmatprep.subr.mxu0 0.0
    %378 = vmatpush2.msra.mxu0 0.0
    %379 = vmatprep.subr.mxu0 0.0
    %380 = vmatpush2.msra.mxu0 0.0
    %381 = vmatprep.subr.mxu0 0.0
    %382 = vmatpush2.msra.mxu0 0.0
    %383 = vmatprep.subr.mxu0 0.0
    %384 = vmatpush2.msra.mxu0 0.0
    %385 = vmatprep.subr.mxu0 0.0
    %386 = vmatpush2.msra.mxu0 0.0
    %387 = vmatprep.subr.mxu0 0.0
    %388 = vmatpush2.msra.mxu0 0.0
    %389 = vmatprep.subr.mxu0 0.0
    %390 = vmatpush2.msra.mxu0 0.0
    %391 = vmatprep.subr.mxu0 0.0
    %392 = vmatpush2.msra.mxu0 0.0
    %393 = vmatprep.subr.mxu0 0.0
    %394 = vmatpush2.msra.mxu0 0.0
    %395 = vmatprep.subr.mxu0 0.0
    %396 = vmatpush2.msra.mxu0 0.0
    %397 = vmatprep.mubr.f32.mxu0 0.0
    %398 = vmatmul.mubr.f32.gmra.mxu0 %v152
    %v399 = vpop.f32.mrf.mxu0
    %v400 = vadd.f32 %v331, %v399
    %v401 = vpop.f32.mrf.mxu0
    %402 = vmatprep.mubr.f32.mxu0 0.0
    %403 = vmatmul.mubr.f32.gmra.mxu0 %v155
    %v404 = vpop.f32.mrf.mxu0
    %v405 = vadd.f32 %v331, %v404
    %v406 = vpop.f32.mrf.mxu0
    %407 = vdwg.mxu0
    %408 = vst.msk [vmem:[#allocation13] sm:$0xff] %vm94, %v400
    %409 = vst.msk [vmem:[#allocation13 + $0x8] sm:$0xff] %vm94, %v405
    // Predicated region
    $region54: #{tpu_custom_call.1} parent=1 // pred_check
      _
    $region55: #{tpu_custom_call.1} parent=1 // pred_check_branch
      %411 = sbr.rel (0) target = $region57
    $region56: #{tpu_custom_call.1} parent=1 // pred_region
      %s413 = ssub.s32 256, 256
      %414 = vsyncadd [#allocation4], %s413
      %s415 = sshll.u32 [#allocation10], 4
      %s416 = int_to_ptr.vmem [resolvable:$true] %s415
      %421 = dma.vmem_to_hbm [thread:$0]  %s416, 256, %s9, [#allocation4], 128, 128, 8
    $region57: #{tpu_custom_call.1} parent=1 // pred_fallthru
      _
    // Predicated region
    $region58: #{tpu_custom_call.1} parent=1 // pred_check
      _
    $region59: #{tpu_custom_call.1} parent=1 // pred_check_branch
      %423 = sbr.rel (0) target = $region61
    $region60: #{tpu_custom_call.1} parent=1 // pred_region
      %s425 = ssub.s32 256, 256
      %426 = vsyncadd [#allocation12], %s425
      %s427 = sshll.u32 [#allocation11], 4
      %s428 = int_to_ptr.vmem [resolvable:$true] %s427
      %433 = dma.vmem_to_hbm [thread:$0]  %s428, 256, %s10, [#allocation12], 128, 128, 8
    $region61: #{tpu_custom_call.1} parent=1 // pred_fallthru
      _
    // Predicated region
    $region62: #{tpu_custom_call.1} parent=1 // pred_check
      _
    $region63: #{tpu_custom_call.1} parent=1 // pred_check_branch
      %435 = sbr.rel (0) target = $region65
    $region64: #{tpu_custom_call.1} parent=1 // pred_region
      %s437 = ssub.s32 256, 256
      %438 = vsyncadd [#allocation12], %s437
      %s439 = sshll.u32 [#allocation13], 4
      %s440 = int_to_ptr.vmem [resolvable:$true] %s439
      %445 = dma.vmem_to_hbm [thread:$0]  %s440, 256, %s11, [#allocation12], 128, 128, 8
    $region65: #{tpu_custom_call.1} parent=1 // pred_fallthru
      _
    // Predicated region
    $region66: #{tpu_custom_call.1} parent=1 // pred_check
      _
    $region67: #{tpu_custom_call.1} parent=1 // pred_check_branch
      %447 = sbr.rel (0) target = $region69
    $region68: #{tpu_custom_call.1} parent=1 // pred_region
      %448 = dma.done [#allocation4], 256
    $region69: #{tpu_custom_call.1} parent=1 // pred_fallthru
      _
    // Predicated region
    $region70: #{tpu_custom_call.1} parent=1 // pred_check
      _
    $region71: #{tpu_custom_call.1} parent=1 // pred_check_branch
      %450 = sbr.rel (0) target = $region73
    $region72: #{tpu_custom_call.1} parent=1 // pred_region
      %451 = dma.done [#allocation12], 256
    $region73: #{tpu_custom_call.1} parent=1 // pred_fallthru
      _
    // Predicated region
    $region74: #{tpu_custom_call.1} parent=1 // pred_check
      _
    $region75: #{tpu_custom_call.1} parent=1 // pred_check_branch
      %453 = sbr.rel (0) target = $region77
    $region76: #{tpu_custom_call.1} parent=1 // pred_region
      %454 = dma.done [#allocation12], 256
    $region77: #{tpu_custom_call.1} parent=1 // pred_fallthru
      _
    %455 = vsyncpa [#allocation3], 1
    %456 = vsyncpa [#allocation6], 1
    %457 = vsyncpa [#allocation9], 1
    %458 = vsyncpa [#allocation4], 1
    %459 = vsyncpa [#allocation12], 1

</llo_original>
